<compile_context>
chip_gen: v7x
topology: tpu7x:2x2x1
jax: 0.10.0
libtpu: 0.0.40
codegen_flags: <defaults>
</compile_context>

<pallas_src>
import functools

import jax
import jax.numpy as jnp
from jax import lax
from jax.experimental import pallas as pl
from jax.experimental.pallas import tpu as pltpu


# ----------------------------------------------------------------------------
# Kernel A: input projections   h_l = x @ W_h + b_h ,  s_l = x @ W_s
# ----------------------------------------------------------------------------
def _proj_kernel(x_ref, wh_ref, bh_ref, ws_ref, h_ref, s_ref):
    x = x_ref[...]
    h_ref[...] = (jnp.dot(x, wh_ref[...], preferred_element_type=jnp.float32)
                  + bh_ref[...])
    s_ref[...] = jnp.dot(x, ws_ref[...], preferred_element_type=jnp.float32)


# ----------------------------------------------------------------------------
# Kernel B: fused kNN + potential-weighted mean/max aggregation + output Linear
# ----------------------------------------------------------------------------
def _gravnet_agg_kernel(k, n_total,
                        x_ref, sq_ref, s_all_ref, h_all_ref, wo_ref, bo_ref,
                        out_ref, nbr_ref):
    tile_idx = pl.program_id(0)
    T, S = sq_ref.shape
    N = s_all_ref.shape[0]
    P = h_all_ref.shape[1]
    Cin = x_ref.shape[1]

    s_q = sq_ref[...]                      # (T, S)  query coords
    s_all = s_all_ref[...]                 # (N, S)  candidate coords

    # squared pairwise distances:  ||a||^2 + ||b||^2 - 2 a.b   (cross term and
    # the candidate-norm row both on the MXU -> no transposes, no sqrt)
    qn = jnp.sum(s_q * s_q, axis=-1, keepdims=True)              # (T, 1)
    an = lax.dot_general(jnp.ones((1, S), jnp.float32),
                         s_all * s_all,
                         dimension_numbers=(((1,), (1,)), ((), ())),
                         preferred_element_type=jnp.float32)      # (1, N)
    cross = lax.dot_general(s_q, s_all,
                            dimension_numbers=(((1,), (1,)), ((), ())),
                            preferred_element_type=jnp.float32)   # (T, N)
    d2 = qn + an - 2.0 * cross

    BIG = jnp.float32(1e30)
    row_ids = tile_idx * T + lax.broadcasted_iota(jnp.int32, (T, N), 0)
    col_ids = lax.broadcasted_iota(jnp.int32, (T, N), 1)
    d2 = jnp.where(col_ids == row_ids, BIG, d2)   # remove self loops

    # --- k-round argmin selection (no matmuls inside the loop) -------------
    sel_rows = []                                  # weighted one-hot rows
    idx_cols = []
    for _ in range(k):                             # k is small & static
        row_min = jnp.min(d2, axis=-1, keepdims=True)            # (T, 1)
        cand = jnp.where(d2 <= row_min, col_ids, n_total)
        jstar = jnp.min(cand, axis=-1, keepdims=True)            # (T, 1) argmin
        onehot = (col_ids == jstar)                              # (T, N)
        w = jnp.exp(-row_min)                                    # EUP slot
        sel_rows.append(w * onehot.astype(jnp.float32))          # (T, N)
        idx_cols.append(jstar)
        d2 = jnp.where(onehot, BIG, d2)            # exclude chosen neighbor

    # single stacked gather: (k*T, N) @ (N, P)  ->  all k messages at once
    sel = jnp.concatenate(sel_rows, axis=0)                       # (k*T, N)
    msgs = jnp.dot(sel, h_all_ref[...],
                   preferred_element_type=jnp.float32)            # (k*T, P)

    mean_acc = jnp.zeros((T, P), jnp.float32)
    max_acc = jnp.full((T, P), -jnp.inf, jnp.float32)
    for r in range(k):                             # static sublane slices
        m = msgs[r * T:(r + 1) * T, :]
        mean_acc = mean_acc + m
        max_acc = jnp.maximum(max_acc, m)
    mean_agg = mean_acc * jnp.float32(1.0 / k)     # constant mul, no divide

    # output Linear split into three matmuls against static weight slices
    # (avoids the lane concat of [mean, max, x] inside the kernel)
    out = (jnp.dot(mean_agg, wo_ref[0:P, :],
                   preferred_element_type=jnp.float32)
           + jnp.dot(max_acc, wo_ref[P:2 * P, :],
                     preferred_element_type=jnp.float32)
           + jnp.dot(x_ref[...], wo_ref[2 * P:2 * P + Cin, :],
                     preferred_element_type=jnp.float32)
           + bo_ref[...])
    out_ref[...] = out
    nbr_ref[...] = jnp.concatenate(idx_cols, axis=-1)             # (T, k)


# ----------------------------------------------------------------------------
# Wrapper
# ----------------------------------------------------------------------------
def gravnet_conv(x, w_h, b_h, w_s, w_o, b_o, *, k, tile=64):
    """GravNetConv_dgl forward.  Returns (out, neighbor_idx, s_l)."""
    N, C_in = x.shape
    P = w_h.shape[1]
    S = w_s.shape[1]
    C_out = w_o.shape[1]
    assert N % tile == 0, "demo wrapper assumes N divisible by the node tile"
    nt = N // tile

    x = x.astype(jnp.float32)
    bh2 = b_h.reshape(1, P).astype(jnp.float32)
    bo2 = b_o.reshape(1, C_out).astype(jnp.float32)

    # ---- kernel A: projections -------------------------------------------
    h_l, s_l = pl.pallas_call(
        _proj_kernel,
        out_shape=(jax.ShapeDtypeStruct((N, P), jnp.float32),
                   jax.ShapeDtypeStruct((N, S), jnp.float32)),
        grid=(nt,),
        in_specs=[pl.BlockSpec((tile, C_in), lambda i: (i, 0)),
                  pl.BlockSpec((C_in, P), lambda i: (0, 0)),
                  pl.BlockSpec((1, P), lambda i: (0, 0)),
                  pl.BlockSpec((C_in, S), lambda i: (0, 0))],
        out_specs=(pl.BlockSpec((tile, P), lambda i: (i, 0)),
                   pl.BlockSpec((tile, S), lambda i: (i, 0))),
        compiler_params=pltpu.CompilerParams(
            dimension_semantics=("parallel",)),
    )(x, w_h.astype(jnp.float32), bh2, w_s.astype(jnp.float32))

    # ---- kernel B: kNN + aggregation + output linear ----------------------
    kernel_b = functools.partial(_gravnet_agg_kernel, k, N)
    out, nbr = pl.pallas_call(
        kernel_b,
        out_shape=(jax.ShapeDtypeStruct((N, C_out), jnp.float32),
                   jax.ShapeDtypeStruct((N, k), jnp.int32)),
        grid=(nt,),
        in_specs=[pl.BlockSpec((tile, C_in), lambda i: (i, 0)),   # x tile
                  pl.BlockSpec((tile, S), lambda i: (i, 0)),      # s_l query
                  pl.BlockSpec((N, S), lambda i: (0, 0)),         # s_l all
                  pl.BlockSpec((N, P), lambda i: (0, 0)),         # h_l all
                  pl.BlockSpec((2 * P + C_in, C_out), lambda i: (0, 0)),
                  pl.BlockSpec((1, C_out), lambda i: (0, 0))],
        out_specs=(pl.BlockSpec((tile, C_out), lambda i: (i, 0)),
                   pl.BlockSpec((tile, k), lambda i: (i, 0))),
        compiler_params=pltpu.CompilerParams(
            dimension_semantics=("parallel",)),
    )(x, s_l, s_l, h_l, w_o.astype(jnp.float32), bo2)

    return out, nbr, s_l


# ----------------------------------------------------------------------------
# Pure-JAX reference
# ----------------------------------------------------------------------------
def _reference(x, w_h, b_h, w_s, w_o, b_o, k):
    h_l = x @ w_h + b_h
    s_l = x @ w_s
    n = x.shape[0]
    qn = jnp.sum(s_l * s_l, axis=-1)
    d2 = qn[:, None] + qn[None, :] - 2.0 * (s_l @ s_l.T)
    d2 = jnp.where(jnp.eye(n, dtype=bool), 1e30, d2)
    _, idx = lax.top_k(-d2, k)                             # nearest first
    dist2 = jnp.take_along_axis(d2, idx, axis=1)           # (N, k)
    w = jnp.exp(-dist2)                                    # potential
    msg = w[..., None] * h_l[idx]                          # (N, k, P)
    mean_agg = jnp.mean(msg, axis=1)
    max_agg = jnp.max(msg, axis=1)
    feat = jnp.concatenate([mean_agg, max_agg, x], axis=-1)
    return feat @ w_o + b_o, idx, s_l


if __name__ == "__main__":
    # small shapes consistent with the module:
    #   N nodes, in_channels=16, space_dimensions=4, propagate_dimensions=8,
    #   out_channels=32, k=4
    N, C_IN, S_DIM, P_DIM, C_OUT, K = 128, 16, 4, 8, 32, 4

    key = jax.random.PRNGKey(0)
    ks = jax.random.split(key, 6)
    x = jax.random.normal(ks[0], (N, C_IN), dtype=jnp.float32)
    w_h = jax.random.normal(ks[1], (C_IN, P_DIM), jnp.float32) / jnp.sqrt(C_IN)
    b_h = 0.1 * jax.random.normal(ks[2], (P_DIM,), jnp.float32)
    w_s = jax.random.normal(ks[3], (C_IN, S_DIM), jnp.float32) / jnp.sqrt(C_IN)
    w_o = 0.1 * jax.random.normal(ks[4], (2 * P_DIM + C_IN, C_OUT), jnp.float32)
    b_o = 0.1 * jax.random.normal(ks[5], (C_OUT,), jnp.float32)

    out, nbr, s_l = gravnet_conv(x, w_h, b_h, w_s, w_o, b_o, k=K, tile=64)
    jax.block_until_ready(out)

    ref_out, ref_idx, ref_s = _reference(x, w_h, b_h, w_s, w_o, b_o, K)

    assert jnp.allclose(s_l, ref_s, atol=1e-4, rtol=1e-4)
    assert jnp.array_equal(jnp.sort(nbr, axis=-1), jnp.sort(ref_idx, axis=-1))
    assert jnp.allclose(out, ref_out, atol=2e-4, rtol=2e-4)
    print("KERNEL_OK")
</pallas_src>

<mosaic_0001>
module attributes {stable_mosaic.version = 11 : i64} {
  func.func @_proj_kernel(%arg0: i32, %arg1: memref<64x16xf32, #tpu.memory_space<vmem>>, %arg2: memref<16x8xf32, #tpu.memory_space<vmem>>, %arg3: memref<1x8xf32, #tpu.memory_space<vmem>>, %arg4: memref<16x4xf32, #tpu.memory_space<vmem>>, %arg5: memref<64x8xf32, #tpu.memory_space<vmem>>, %arg6: memref<64x4xf32, #tpu.memory_space<vmem>>) attributes {dimension_semantics = [#tpu.dimension_semantics<parallel>], iteration_bounds = array<i64: 2>, scalar_prefetch = 0 : i64, scratch_operands = 0 : i64, tpu.core_type = #tpu.core_type<tc>, window_params = [{transform_indices = @transform_0, window_bounds = array<i64: 64, 16>}, {pipeline_mode = #tpu.pipeline_mode<synchronous>, transform_indices = @transform_1, window_bounds = array<i64: 16, 8>}, {pipeline_mode = #tpu.pipeline_mode<synchronous>, transform_indices = @transform_2, window_bounds = array<i64: 1, 8>}, {pipeline_mode = #tpu.pipeline_mode<synchronous>, transform_indices = @transform_3, window_bounds = array<i64: 16, 4>}, {transform_indices = @transform_4, window_bounds = array<i64: 64, 8>}, {transform_indices = @transform_5, window_bounds = array<i64: 64, 4>}]} {
    %c0 = arith.constant 0 : index
    %c0_0 = arith.constant 0 : index
    %0 = vector.load %arg1[%c0, %c0_0] : memref<64x16xf32, #tpu.memory_space<vmem>>, vector<64x16xf32>
    %c0_1 = arith.constant 0 : index
    %c0_2 = arith.constant 0 : index
    %1 = vector.load %arg2[%c0_1, %c0_2] : memref<16x8xf32, #tpu.memory_space<vmem>>, vector<16x8xf32>
    %cst = arith.constant dense<0.000000e+00> : vector<64x8xf32>
    %2 = tpu.matmul %0, %1, %cst {dimension_numbers = #tpu.dot_dimension_numbers<[1], [0], [0], [1], [0, 0, 1, 1], [], []>} : vector<64x16xf32>, vector<16x8xf32>, vector<64x8xf32> -> vector<64x8xf32>
    %c0_3 = arith.constant 0 : index
    %c0_4 = arith.constant 0 : index
    %3 = vector.load %arg3[%c0_3, %c0_4] : memref<1x8xf32, #tpu.memory_space<vmem>>, vector<1x8xf32>
    %4 = vector.broadcast %3 : vector<1x8xf32> to vector<64x8xf32>
    %5 = arith.addf %2, %4 : vector<64x8xf32>
    %c0_5 = arith.constant 0 : index
    %c0_6 = arith.constant 0 : index
    %6 = vector.load %arg5[%c0_5, %c0_6] : memref<64x8xf32, #tpu.memory_space<vmem>>, vector<64x8xf32>
    tpu.vector_store %arg5[%c0_5, %c0_6], %5 {strides = array<i32>} : memref<64x8xf32, #tpu.memory_space<vmem>>, vector<64x8xf32>,
    %c0_7 = arith.constant 0 : index
    %c0_8 = arith.constant 0 : index
    %7 = vector.load %arg4[%c0_7, %c0_8] : memref<16x4xf32, #tpu.memory_space<vmem>>, vector<16x4xf32>
    %cst_9 = arith.constant dense<0.000000e+00> : vector<64x4xf32>
    %8 = tpu.matmul %0, %7, %cst_9 {dimension_numbers = #tpu.dot_dimension_numbers<[1], [0], [0], [1], [0, 0, 1, 1], [], []>} : vector<64x16xf32>, vector<16x4xf32>, vector<64x4xf32> -> vector<64x4xf32>
    %c0_10 = arith.constant 0 : index
    %c0_11 = arith.constant 0 : index
    %9 = vector.load %arg6[%c0_10, %c0_11] : memref<64x4xf32, #tpu.memory_space<vmem>>, vector<64x4xf32>
    tpu.vector_store %arg6[%c0_10, %c0_11], %8 {strides = array<i32>} : memref<64x4xf32, #tpu.memory_space<vmem>>, vector<64x4xf32>,
    return
  }
  func.func @transform_0(%arg0: i32) -> (i32, i32) {
    %c0_i32 = arith.constant 0 : i32
    %c0_i32_0 = arith.constant 0 : i32
    return %arg0, %c0_i32 : i32, i32
  }
  func.func @transform_1(%arg0: i32) -> (i32, i32) {
    %c0_i32 = arith.constant 0 : i32
    %c0_i32_0 = arith.constant 0 : i32
    %c0_i32_1 = arith.constant 0 : i32
    return %c0_i32, %c0_i32_0 : i32, i32
  }
  func.func @transform_2(%arg0: i32) -> (i32, i32) {
    %c0_i32 = arith.constant 0 : i32
    %c0_i32_0 = arith.constant 0 : i32
    %c0_i32_1 = arith.constant 0 : i32
    return %c0_i32, %c0_i32_0 : i32, i32
  }
  func.func @transform_3(%arg0: i32) -> (i32, i32) {
    %c0_i32 = arith.constant 0 : i32
    %c0_i32_0 = arith.constant 0 : i32
    %c0_i32_1 = arith.constant 0 : i32
    return %c0_i32, %c0_i32_0 : i32, i32
  }
  func.func @transform_4(%arg0: i32) -> (i32, i32) {
    %c0_i32 = arith.constant 0 : i32
    %c0_i32_0 = arith.constant 0 : i32
    return %arg0, %c0_i32 : i32, i32
  }
  func.func @transform_5(%arg0: i32) -> (i32, i32) {
    %c0_i32 = arith.constant 0 : i32
    %c0_i32_0 = arith.constant 0 : i32
    return %arg0, %c0_i32 : i32, i32
  }
}

</mosaic_0001>

<llo_original>
// kernel: tpu_custom_call.1
$region0: #{tpu_custom_call.1}
  #allocation0 [shape = 'u32[]', space=smem, size = 0x4, offset = 0x4, fixed_abs, tag = 'smem constant byte address 0x4 - core index']
  #allocation1 [shape = 'u32[144,128]{1,0:T(1,128)}', space=vmem, size = 0x12000, scoped, tag = 'internal scratch']
  %s0 = inlined_call_operand.vmem [shape: f32[128,16], index: 0, kind: input, shape index: {}]
  %s1 = inlined_call_operand.vmem [shape: f32[16,8], index: 1, kind: input, shape index: {}]
  %s2 = inlined_call_operand.vmem [shape: f32[1,8], index: 2, kind: input, shape index: {}]
  %s3 = inlined_call_operand.vmem [shape: f32[16,4], index: 3, kind: input, shape index: {}]
  %s4 = inlined_call_operand.vmem [shape: f32[128,8], index: 4, kind: output, shape index: {0}]
  %s5 = inlined_call_operand.vmem [shape: f32[128,4], index: 5, kind: output, shape index: {1}]
  %6 = xla_tuple %s4, %s5
  %s7 = sld [smem:[#allocation0]]
  $region57: #{tpu_custom_call.1} parent=0
    _
  %s9 = ssub.s32 1, %s7
  %s10 = scalar_select 0, %s9, %s7
  loop: start=0, step=1, limit=4
  $region2: #{tpu_custom_call.1} parent=0 // loop_pre_header
    _
  $region3: #{tpu_custom_call.1} parent=0 // loop_header
    %s12 = sphi 0, %s16
    %p13 = scmp.ge.s32.totalorder %s12, 4
    %s22 = sphi 0, %s24
    %s25 = sphi 0, %s22
    %s26 = sphi 0, %s25
    %s42 = sphi 0, %s26
    %s46 = sphi 0, %s46
    %s48 = sphi 0, %s46
    %s49 = sphi 0, %s48
    %s63 = sphi 0, %s49
    %s67 = sphi 0, %s67
    %s69 = sphi 0, %s67
    %s70 = sphi 0, %s69
    %s84 = sphi 0, %s70
    %s88 = sphi 0, %s88
    %s90 = sphi 0, %s88
    %s91 = sphi 0, %s90
    %s105 = sphi 0, %s91
    %s111 = sphi 0, %s113
    %s114 = sphi 0, %s111
    %s115 = sphi 0, %s114
    %s131 = sphi 0, %s115
    %s137 = sphi 0, %s139
    %s140 = sphi 0, %s137
    %s141 = sphi 0, %s140
    %s157 = sphi 0, %s141
  $region4: #{tpu_custom_call.1} parent=0 // loop_header_branch
    %15 = sbr.rel (%p13) target = $region8
  $region5: #{tpu_custom_call.1} parent=0 // loop_body
    %s17 = ssub.s32 %s12, 1
    %s18 = ssub.s32 %s12, 2
    %s19 = sadd.s32 %s12, 1
    %s20 = ssub.s32 %s12, %s19
    %p21 = scmp.eq.s32.totalorder %s20, 0
    %s23 = sadd.s32 %s22, 1
    %s24 = scalar_select %p21, %s22, %s23
    %p27 = pneg %p21
    %p28 = scmp.eq.s32.totalorder %s12, 1
    %p29 = por %p27, %p28
    %p30 = scmp.ne.s32.totalorder %s22, %s25
    %p31 = scmp.eq.s32.totalorder %s12, 0
    %p32 = por %p30, %p31
    %p33 = scmp.ne.s32.totalorder %s22, %s25
    %p34 = scmp.eq.s32.totalorder %s17, 1
    %p35 = por %p33, %p34
    %p36 = scmp.ne.s32.totalorder %s25, %s26
    %p37 = scmp.eq.s32.totalorder %s17, 0
    %p38 = por %p36, %p37
    %p39 = scmp.ne.s32.totalorder %s25, %s26
    %p40 = scmp.eq.s32.totalorder %s18, 1
    %p41 = por %p39, %p40
    %p43 = scmp.ne.s32.totalorder %s26, %s42
    %p44 = scmp.eq.s32.totalorder %s18, 0
    %p45 = por %p43, %p44
    %s47 = sadd.s32 %s46, 1
    %p50 = scmp.eq.s32.totalorder %s12, 1
    %p51 = scmp.ne.s32.totalorder %s46, %s48
    %p52 = scmp.eq.s32.totalorder %s12, 0
    %p53 = por %p51, %p52
    %p54 = scmp.ne.s32.totalorder %s46, %s48
    %p55 = scmp.eq.s32.totalorder %s17, 1
    %p56 = por %p54, %p55
    %p57 = scmp.ne.s32.totalorder %s48, %s49
    %p58 = scmp.eq.s32.totalorder %s17, 0
    %p59 = por %p57, %p58
    %p60 = scmp.ne.s32.totalorder %s48, %s49
    %p61 = scmp.eq.s32.totalorder %s18, 1
    %p62 = por %p60, %p61
    %p64 = scmp.ne.s32.totalorder %s49, %s63
    %p65 = scmp.eq.s32.totalorder %s18, 0
    %p66 = por %p64, %p65
    %s68 = sadd.s32 %s67, 1
    %p71 = scmp.eq.s32.totalorder %s12, 1
    %p72 = scmp.ne.s32.totalorder %s67, %s69
    %p73 = scmp.eq.s32.totalorder %s12, 0
    %p74 = por %p72, %p73
    %p75 = scmp.ne.s32.totalorder %s67, %s69
    %p76 = scmp.eq.s32.totalorder %s17, 1
    %p77 = por %p75, %p76
    %p78 = scmp.ne.s32.totalorder %s69, %s70
    %p79 = scmp.eq.s32.totalorder %s17, 0
    %p80 = por %p78, %p79
    %p81 = scmp.ne.s32.totalorder %s69, %s70
    %p82 = scmp.eq.s32.totalorder %s18, 1
    %p83 = por %p81, %p82
    %p85 = scmp.ne.s32.totalorder %s70, %s84
    %p86 = scmp.eq.s32.totalorder %s18, 0
    %p87 = por %p85, %p86
    %s89 = sadd.s32 %s88, 1
    %p92 = scmp.eq.s32.totalorder %s12, 1
    %p93 = scmp.ne.s32.totalorder %s88, %s90
    %p94 = scmp.eq.s32.totalorder %s12, 0
    %p95 = por %p93, %p94
    %p96 = scmp.ne.s32.totalorder %s88, %s90
    %p97 = scmp.eq.s32.totalorder %s17, 1
    %p98 = por %p96, %p97
    %p99 = scmp.ne.s32.totalorder %s90, %s91
    %p100 = scmp.eq.s32.totalorder %s17, 0
    %p101 = por %p99, %p100
    %p102 = scmp.ne.s32.totalorder %s90, %s91
    %p103 = scmp.eq.s32.totalorder %s18, 1
    %p104 = por %p102, %p103
    %p106 = scmp.ne.s32.totalorder %s91, %s105
    %p107 = scmp.eq.s32.totalorder %s18, 0
    %p108 = por %p106, %p107
    %s109 = ssub.s32 %s12, %s19
    %p110 = scmp.eq.s32.totalorder %s109, 0
    %s112 = sadd.s32 %s111, 1
    %s113 = scalar_select %p110, %s111, %s112
    %p116 = pneg %p110
    %p117 = scmp.eq.s32.totalorder %s12, 1
    %p118 = por %p116, %p117
    %p119 = scmp.ne.s32.totalorder %s111, %s114
    %p120 = scmp.eq.s32.totalorder %s12, 0
    %p121 = por %p119, %p120
    %p122 = scmp.ne.s32.totalorder %s111, %s114
    %p123 = scmp.eq.s32.totalorder %s17, 1
    %p124 = por %p122, %p123
    %p125 = scmp.ne.s32.totalorder %s114, %s115
    %p126 = scmp.eq.s32.totalorder %s17, 0
    %p127 = por %p125, %p126
    %p128 = scmp.ne.s32.totalorder %s114, %s115
    %p129 = scmp.eq.s32.totalorder %s18, 1
    %p130 = por %p128, %p129
    %p132 = scmp.ne.s32.totalorder %s115, %s131
    %p133 = scmp.eq.s32.totalorder %s18, 0
    %p134 = por %p132, %p133
    %s135 = ssub.s32 %s12, %s19
    %p136 = scmp.eq.s32.totalorder %s135, 0
    %s138 = sadd.s32 %s137, 1
    %s139 = scalar_select %p136, %s137, %s138
    %p142 = pneg %p136
    %p143 = scmp.eq.s32.totalorder %s12, 1
    %p144 = por %p142, %p143
    %p145 = scmp.ne.s32.totalorder %s137, %s140
    %p146 = scmp.eq.s32.totalorder %s12, 0
    %p147 = por %p145, %p146
    %p148 = scmp.ne.s32.totalorder %s137, %s140
    %p149 = scmp.eq.s32.totalorder %s17, 1
    %p150 = por %p148, %p149
    %p151 = scmp.ne.s32.totalorder %s140, %s141
    %p152 = scmp.eq.s32.totalorder %s17, 0
    %p153 = por %p151, %p152
    %p154 = scmp.ne.s32.totalorder %s140, %s141
    %p155 = scmp.eq.s32.totalorder %s18, 1
    %p156 = por %p154, %p155
    %p158 = scmp.ne.s32.totalorder %s141, %s157
    %p159 = scmp.eq.s32.totalorder %s18, 0
    %p160 = por %p158, %p159
    %p161 = scmp.le.s32.totalorder 1, %s12
    %p162 = scmp.lt.s32.totalorder %s12, 3
    %p163 = pnand %p161, %p162
    %p164 = pneg %p163
    // Predicated region
    $region9: #{tpu_custom_call.1} parent=5 // pred_check
      _
    $region10: #{tpu_custom_call.1} parent=5 // pred_check_branch
      %166 = sbr.rel (%p163) target = $region12
    $region11: #{tpu_custom_call.1} parent=5 // pred_region
      %s167 = ssub.s32 %s12, 1
      // Predicated region
      $region13: #{tpu_custom_call.1} parent=11 // pred_check
        %p168 = pneg %p59
      $region14: #{tpu_custom_call.1} parent=11 // pred_check_branch
        %170 = sbr.rel (%p168) target = $region16
      $region15: #{tpu_custom_call.1} parent=11 // pred_region
        _
      $region16: #{tpu_custom_call.1} parent=11 // pred_fallthru
        _
      // Predicated region
      $region17: #{tpu_custom_call.1} parent=11 // pred_check
        %p171 = pneg %p80
      $region18: #{tpu_custom_call.1} parent=11 // pred_check_branch
        %173 = sbr.rel (%p171) target = $region20
      $region19: #{tpu_custom_call.1} parent=11 // pred_region
        _
      $region20: #{tpu_custom_call.1} parent=11 // pred_fallthru
        _
      // Predicated region
      $region21: #{tpu_custom_call.1} parent=11 // pred_check
        %p174 = pneg %p101
      $region22: #{tpu_custom_call.1} parent=11 // pred_check_branch
        %176 = sbr.rel (%p174) target = $region24
      $region23: #{tpu_custom_call.1} parent=11 // pred_region
        _
      $region24: #{tpu_custom_call.1} parent=11 // pred_fallthru
        _
    $region12: #{tpu_custom_call.1} parent=5 // pred_fallthru
      _
    %p177 = scmp.lt.s32.totalorder %s12, 2
    // Predicated region
    $region25: #{tpu_custom_call.1} parent=5 // pred_check
      %p178 = pneg %p177
    $region26: #{tpu_custom_call.1} parent=5 // pred_check_branch
      %180 = sbr.rel (%p178) target = $region28
    $region27: #{tpu_custom_call.1} parent=5 // pred_region
      // Predicated region
      $region29: #{tpu_custom_call.1} parent=27 // pred_check
        %p181 = pneg %p32
      $region30: #{tpu_custom_call.1} parent=27 // pred_check_branch
        %183 = sbr.rel (%p181) target = $region32
      $region31: #{tpu_custom_call.1} parent=27 // pred_region
        %s184 = smul.u32 8, %s12
        %p185 = scmp.lt.s32.totalorder %s184, 15
        %s186 = scalar_select %p185, %s184, 15
        %s187 = smul.addr %s186, 8
        %s188 = scalar_lea.vmem %s0, %s187
        %s189 = smul.u32 8, %s12
      $region32: #{tpu_custom_call.1} parent=27 // pred_fallthru
        _
    $region28: #{tpu_custom_call.1} parent=5 // pred_fallthru
      _
    %p190 = scmp.le.s32.totalorder 1, %s12
    %p191 = scmp.lt.s32.totalorder %s12, 3
    %p192 = pnand %p190, %p191
    %p193 = pneg %p192
    // Predicated region
    $region33: #{tpu_custom_call.1} parent=5 // pred_check
      _
    $region34: #{tpu_custom_call.1} parent=5 // pred_check_branch
      %195 = sbr.rel (%p192) target = $region36
    $region35: #{tpu_custom_call.1} parent=5 // pred_region
      %s196 = ssub.s32 %s12, 1
      %s197 = smul.u32 8, %s17
      %p198 = scmp.lt.s32.totalorder %s197, 15
      %s199 = scalar_select %p198, %s197, 15
      %s200 = smul.addr %s199, 8
      %s201 = scalar_lea.vmem %s0, %s200
      %p202 = pneg %p38
      %p203 = pneg %p35
      %p204 = pneg %p59
      %p205 = pneg %p56
      %p206 = pneg %p80
      %p207 = pneg %p77
      %p208 = pneg %p101
      %p209 = pneg %p98
      %p210 = pneg %p127
      %p211 = pneg %p124
      %s212 = smul.u32 8, %s17
      %p213 = scmp.lt.s32.totalorder %s212, 15
      %s214 = scalar_select %p213, %s212, 15
      %s215 = smul.addr %s214, 8
      %s216 = scalar_lea.vmem %s4, %s215
      %p217 = pneg %p153
      %p218 = pneg %p150
      %s219 = smul.u32 8, %s17
      %p220 = scmp.lt.s32.totalorder %s219, 15
      %s221 = scalar_select %p220, %s219, 15
      %s222 = smul.addr %s221, 8
      %s223 = scalar_lea.vmem %s5, %s222
      %s224 = smul.u32 8, %s17
      %p225 = scmp.lt.s32.totalorder %s224, 15
      %s226 = scalar_select %p225, %s224, 15
      %s227 = smul.addr %s226, 8
      %s228 = scalar_lea.vmem %s0, %s227
      %s229 = smul.u32 8, %s17
      %s230 = smul.u32 8, %s17
      %p231 = scmp.lt.s32.totalorder %s230, 15
      %s232 = scalar_select %p231, %s230, 15
      %s233 = smul.addr %s232, 8
      %s234 = scalar_lea.vmem %s4, %s233
      %s235 = smul.u32 8, %s17
      %s236 = smul.u32 8, %s17
      %p237 = scmp.lt.s32.totalorder %s236, 15
      %s238 = scalar_select %p237, %s236, 15
      %s239 = smul.addr %s238, 8
      %s240 = scalar_lea.vmem %s5, %s239
      %s241 = smul.u32 8, %s17
      %v242 = vld [vmem:[%s228] sm:$0xff]
      %v243 = vld [vmem:[%s228 + $0x8] sm:$0xff]
      %v244 = vld [vmem:[%s228 + $0x10] sm:$0xff]
      %v245 = vld [vmem:[%s228 + $0x18] sm:$0xff]
      %v246 = vld [vmem:[%s228 + $0x20] sm:$0xff]
      %v247 = vld [vmem:[%s228 + $0x28] sm:$0xff]
      %v248 = vld [vmem:[%s228 + $0x30] sm:$0xff]
      %v249 = vld [vmem:[%s228 + $0x38] sm:$0xff]
      %v250 = vld [vmem:[%s1] sm:$0xff]
      %v251 = vld [vmem:[%s1 + $0x8] sm:$0xff]
      %v252 = vld [vmem:[%s2] sm:$0x1]
      %v254 = vlaneseq
      %v255 = vshrl.u32 %v254, 7
      %v256 = vsub.s32 0, %v255
      %v257 = vrot.slane %v252, %v256
      %vm259 = vcmask 130048
      %v261 = vsel %vm259, %v242, 0
      %v264 = vsel %vm259, %v243, 0
      %v267 = vsel %vm259, %v244, 0
      %v270 = vsel %vm259, %v245, 0
      %v273 = vsel %vm259, %v246, 0
      %v276 = vsel %vm259, %v247, 0
      %v279 = vsel %vm259, %v248, 0
      %v282 = vsel %vm259, %v249, 0
      %284 = vmatprep.subr.mxu0 0.0
      %285 = vmatpush1.msra.mxu0 %v250
      %286 = vmatprep.subr.mxu0 0.0
      %287 = vmatpush1.msra.mxu0 %v251
      %288 = vmatprep.subr.mxu0 0.0
      %289 = vmatpush1.msra.mxu0 0.0
      %290 = vmatprep.subr.mxu0 0.0
      %291 = vmatpush1.msra.mxu0 0.0
      %292 = vmatprep.subr.mxu0 0.0
      %293 = vmatpush1.msra.mxu0 0.0
      %294 = vmatprep.subr.mxu0 0.0
      %295 = vmatpush1.msra.mxu0 0.0
      %296 = vmatprep.subr.mxu0 0.0
      %297 = vmatpush1.msra.mxu0 0.0
      %298 = vmatprep.subr.mxu0 0.0
      %299 = vmatpush1.msra.mxu0 0.0
      %300 = vmatprep.subr.mxu0 0.0
      %301 = vmatpush1.msra.mxu0 0.0
      %302 = vmatprep.subr.mxu0 0.0
      %303 = vmatpush1.msra.mxu0 0.0
      %304 = vmatprep.subr.mxu0 0.0
      %305 = vmatpush1.msra.mxu0 0.0
      %306 = vmatprep.subr.mxu0 0.0
      %307 = vmatpush1.msra.mxu0 0.0
      %308 = vmatprep.subr.mxu0 0.0
      %309 = vmatpush1.msra.mxu0 0.0
      %310 = vmatprep.subr.mxu0 0.0
      %311 = vmatpush1.msra.mxu0 0.0
      %312 = vmatprep.subr.mxu0 0.0
      %313 = vmatpush1.msra.mxu0 0.0
      %314 = vmatprep.subr.mxu0 0.0
      %315 = vmatpush1.msra.mxu0 0.0
      %316 = vmatprep.subr.mxu0 0.0
      %317 = vmatpush1.msra.mxu0 0.0
      %318 = vmatprep.subr.mxu0 0.0
      %319 = vmatpush1.msra.mxu0 0.0
      %320 = vmatprep.subr.mxu0 0.0
      %321 = vmatpush1.msra.mxu0 0.0
      %322 = vmatprep.subr.mxu0 0.0
      %323 = vmatpush1.msra.mxu0 0.0
      %324 = vmatprep.subr.mxu0 0.0
      %325 = vmatpush1.msra.mxu0 0.0
      %326 = vmatprep.subr.mxu0 0.0
      %327 = vmatpush1.msra.mxu0 0.0
      %328 = vmatprep.subr.mxu0 0.0
      %329 = vmatpush1.msra.mxu0 0.0
      %330 = vmatprep.subr.mxu0 0.0
      %331 = vmatpush1.msra.mxu0 0.0
      %332 = vmatprep.subr.mxu0 0.0
      %333 = vmatpush1.msra.mxu0 0.0
      %334 = vmatprep.subr.mxu0 0.0
      %335 = vmatpush1.msra.mxu0 0.0
      %336 = vmatprep.subr.mxu0 0.0
      %337 = vmatpush1.msra.mxu0 0.0
      %338 = vmatprep.subr.mxu0 0.0
      %339 = vmatpush1.msra.mxu0 0.0
      %340 = vmatprep.subr.mxu0 0.0
      %341 = vmatpush1.msra.mxu0 0.0
      %342 = vmatprep.subr.mxu0 0.0
      %343 = vmatpush1.msra.mxu0 0.0
      %344 = vmatprep.subr.mxu0 0.0
      %345 = vmatpush1.msra.mxu0 0.0
      %346 = vmatprep.subr.mxu0 0.0
      %347 = vmatpush1.msra.mxu0 0.0
      %348 = vmatprep.mubr.f32.mxu0 0.0
      %349 = vmatmul.mubr.f32.gmra.mrb[0].mxu0 %v261
      %v350 = vpop.f32.mrb[0].mxu0
      %v351 = vadd.f32 %v257, %v350
      %v352 = vpop.f32.mrb[0].mxu0
      %353 = vmatprep.mubr.f32.mxu0 0.0
      %354 = vmatmul.mubr.f32.gmra.mrb[0].mxu0 %v264
      %v355 = vpop.f32.mrb[0].mxu0
      %v356 = vadd.f32 %v257, %v355
      %v357 = vpop.f32.mrb[0].mxu0
      %358 = vmatprep.mubr.f32.mxu0 0.0
      %359 = vmatmul.mubr.f32.gmra.mrb[0].mxu0 %v267
      %v360 = vpop.f32.mrb[0].mxu0
      %v361 = vadd.f32 %v257, %v360
      %v362 = vpop.f32.mrb[0].mxu0
      %363 = vmatprep.mubr.f32.mxu0 0.0
      %364 = vmatmul.mubr.f32.gmra.mrb[0].mxu0 %v270
      %v365 = vpop.f32.mrb[0].mxu0
      %v366 = vadd.f32 %v257, %v365
      %v367 = vpop.f32.mrb[0].mxu0
      %368 = vmatprep.mubr.f32.mxu0 0.0
      %369 = vmatmul.mubr.f32.gmra.mrb[0].mxu0 %v273
      %v370 = vpop.f32.mrb[0].mxu0
      %v371 = vadd.f32 %v257, %v370
      %v372 = vpop.f32.mrb[0].mxu0
      %373 = vmatprep.mubr.f32.mxu0 0.0
      %374 = vmatmul.mubr.f32.gmra.mrb[0].mxu0 %v276
      %v375 = vpop.f32.mrb[0].mxu0
      %v376 = vadd.f32 %v257, %v375
      %v377 = vpop.f32.mrb[0].mxu0
      %378 = vmatprep.mubr.f32.mxu0 0.0
      %379 = vmatmul.mubr.f32.gmra.mrb[0].mxu0 %v279
      %v380 = vpop.f32.mrb[0].mxu0
      %v381 = vadd.f32 %v257, %v380
      %v382 = vpop.f32.mrb[0].mxu0
      %383 = vmatprep.mubr.f32.mxu0 0.0
      %384 = vmatmul.mubr.f32.gmra.mrb[0].mxu0 %v282
      %v385 = vpop.f32.mrb[0].mxu0
      %v386 = vadd.f32 %v257, %v385
      %v387 = vpop.f32.mrb[0].mxu0
      %388 = vdwg.mxu0
      %vm389 = vcmask 64512
      %390 = vst.msk [vmem:[%s234] sm:$0xff] %vm389, %v351
      %391 = vst.msk [vmem:[%s234 + $0x8] sm:$0xff] %vm389, %v356
      %392 = vst.msk [vmem:[%s234 + $0x10] sm:$0xff] %vm389, %v361
      %393 = vst.msk [vmem:[%s234 + $0x18] sm:$0xff] %vm389, %v366
      %394 = vst.msk [vmem:[%s234 + $0x20] sm:$0xff] %vm389, %v371
      %395 = vst.msk [vmem:[%s234 + $0x28] sm:$0xff] %vm389, %v376
      %396 = vst.msk [vmem:[%s234 + $0x30] sm:$0xff] %vm389, %v381
      %397 = vst.msk [vmem:[%s234 + $0x38] sm:$0xff] %vm389, %v386
      %v398 = vld [vmem:[%s3] sm:$0xff]
      %v399 = vld [vmem:[%s3 + $0x8] sm:$0xff]
      %400 = vmatprep.subr.mxu0 0.0
      %401 = vmatpush1.msra.mxu0 %v398
      %402 = vmatprep.subr.mxu0 0.0
      %403 = vmatpush1.msra.mxu0 %v399
      %404 = vmatprep.subr.mxu0 0.0
      %405 = vmatpush1.msra.mxu0 0.0
      %406 = vmatprep.subr.mxu0 0.0
      %407 = vmatpush1.msra.mxu0 0.0
      %408 = vmatprep.subr.mxu0 0.0
      %409 = vmatpush1.msra.mxu0 0.0
      %410 = vmatprep.subr.mxu0 0.0
      %411 = vmatpush1.msra.mxu0 0.0
      %412 = vmatprep.subr.mxu0 0.0
      %413 = vmatpush1.msra.mxu0 0.0
      %414 = vmatprep.subr.mxu0 0.0
      %415 = vmatpush1.msra.mxu0 0.0
      %416 = vmatprep.subr.mxu0 0.0
      %417 = vmatpush1.msra.mxu0 0.0
      %418 = vmatprep.subr.mxu0 0.0
      %419 = vmatpush1.msra.mxu0 0.0
      %420 = vmatprep.subr.mxu0 0.0
      %421 = vmatpush1.msra.mxu0 0.0
      %422 = vmatprep.subr.mxu0 0.0
      %423 = vmatpush1.msra.mxu0 0.0
      %424 = vmatprep.subr.mxu0 0.0
      %425 = vmatpush1.msra.mxu0 0.0
      %426 = vmatprep.subr.mxu0 0.0
      %427 = vmatpush1.msra.mxu0 0.0
      %428 = vmatprep.subr.mxu0 0.0
      %429 = vmatpush1.msra.mxu0 0.0
      %430 = vmatprep.subr.mxu0 0.0
      %431 = vmatpush1.msra.mxu0 0.0
      %432 = vmatprep.subr.mxu0 0.0
      %433 = vmatpush1.msra.mxu0 0.0
      %434 = vmatprep.subr.mxu0 0.0
      %435 = vmatpush1.msra.mxu0 0.0
      %436 = vmatprep.subr.mxu0 0.0
      %437 = vmatpush1.msra.mxu0 0.0
      %438 = vmatprep.subr.mxu0 0.0
      %439 = vmatpush1.msra.mxu0 0.0
      %440 = vmatprep.subr.mxu0 0.0
      %441 = vmatpush1.msra.mxu0 0.0
      %442 = vmatprep.subr.mxu0 0.0
      %443 = vmatpush1.msra.mxu0 0.0
      %444 = vmatprep.subr.mxu0 0.0
      %445 = vmatpush1.msra.mxu0 0.0
      %446 = vmatprep.subr.mxu0 0.0
      %447 = vmatpush1.msra.mxu0 0.0
      %448 = vmatprep.subr.mxu0 0.0
      %449 = vmatpush1.msra.mxu0 0.0
      %450 = vmatprep.subr.mxu0 0.0
      %451 = vmatpush1.msra.mxu0 0.0
      %452 = vmatprep.subr.mxu0 0.0
      %453 = vmatpush1.msra.mxu0 0.0
      %454 = vmatprep.subr.mxu0 0.0
      %455 = vmatpush1.msra.mxu0 0.0
      %456 = vmatprep.subr.mxu0 0.0
      %457 = vmatpush1.msra.mxu0 0.0
      %458 = vmatprep.subr.mxu0 0.0
      %459 = vmatpush1.msra.mxu0 0.0
      %460 = vmatprep.subr.mxu0 0.0
      %461 = vmatpush1.msra.mxu0 0.0
      %462 = vmatprep.subr.mxu0 0.0
      %463 = vmatpush1.msra.mxu0 0.0
      %464 = vmatprep.mubr.f32.mxu0 0.0
      %465 = vmatmul.mubr.f32.gmra.mrb[0].mxu0 %v261
      %v466 = vpop.f32.mrb[0].mxu0
      %v467 = vadd.f32 0.0, %v466
      %v468 = vpop.f32.mrb[0].mxu0
      %469 = vmatprep.mubr.f32.mxu0 0.0
      %470 = vmatmul.mubr.f32.gmra.mrb[0].mxu0 %v264
      %v471 = vpop.f32.mrb[0].mxu0
      %v472 = vadd.f32 0.0, %v471
      %v473 = vpop.f32.mrb[0].mxu0
      %474 = vmatprep.mubr.f32.mxu0 0.0
      %475 = vmatmul.mubr.f32.gmra.mrb[0].mxu0 %v267
      %v476 = vpop.f32.mrb[0].mxu0
      %v477 = vadd.f32 0.0, %v476
      %v478 = vpop.f32.mrb[0].mxu0
      %479 = vmatprep.mubr.f32.mxu0 0.0
      %480 = vmatmul.mubr.f32.gmra.mrb[0].mxu0 %v270
      %v481 = vpop.f32.mrb[0].mxu0
      %v482 = vadd.f32 0.0, %v481
      %v483 = vpop.f32.mrb[0].mxu0
      %484 = vmatprep.mubr.f32.mxu0 0.0
      %485 = vmatmul.mubr.f32.gmra.mrb[0].mxu0 %v273
      %v486 = vpop.f32.mrb[0].mxu0
      %v487 = vadd.f32 0.0, %v486
      %v488 = vpop.f32.mrb[0].mxu0
      %489 = vmatprep.mubr.f32.mxu0 0.0
      %490 = vmatmul.mubr.f32.gmra.mrb[0].mxu0 %v276
      %v491 = vpop.f32.mrb[0].mxu0
      %v492 = vadd.f32 0.0, %v491
      %v493 = vpop.f32.mrb[0].mxu0
      %494 = vmatprep.mubr.f32.mxu0 0.0
      %495 = vmatmul.mubr.f32.gmra.mrb[0].mxu0 %v279
      %v496 = vpop.f32.mrb[0].mxu0
      %v497 = vadd.f32 0.0, %v496
      %v498 = vpop.f32.mrb[0].mxu0
      %499 = vmatprep.mubr.f32.mxu0 0.0
      %500 = vmatmul.mubr.f32.gmra.mrb[0].mxu0 %v282
      %v501 = vpop.f32.mrb[0].mxu0
      %v502 = vadd.f32 0.0, %v501
      %v503 = vpop.f32.mrb[0].mxu0
      %504 = vdwg.mxu0
      %vm505 = vcmask 31744
      %506 = vst.msk [vmem:[%s240] sm:$0xff] %vm505, %v467
      %507 = vst.msk [vmem:[%s240 + $0x8] sm:$0xff] %vm505, %v472
      %508 = vst.msk [vmem:[%s240 + $0x10] sm:$0xff] %vm505, %v477
      %509 = vst.msk [vmem:[%s240 + $0x18] sm:$0xff] %vm505, %v482
      %510 = vst.msk [vmem:[%s240 + $0x20] sm:$0xff] %vm505, %v487
      %511 = vst.msk [vmem:[%s240 + $0x28] sm:$0xff] %vm505, %v492
      %512 = vst.msk [vmem:[%s240 + $0x30] sm:$0xff] %vm505, %v497
      %513 = vst.msk [vmem:[%s240 + $0x38] sm:$0xff] %vm505, %v502
      %s514 = smul.u32 8, %s17
      %p515 = scmp.lt.s32.totalorder %s514, 15
      %s516 = scalar_select %p515, %s514, 15
      %s517 = smul.addr %s516, 8
      %s518 = scalar_lea.vmem %s4, %s517
      %s519 = smul.u32 8, %s17
      %p520 = scmp.lt.s32.totalorder %s519, 15
      %s521 = scalar_select %p520, %s519, 15
      %s522 = smul.addr %s521, 8
      %s523 = scalar_lea.vmem %s5, %s522
      // Predicated region
      $region37: #{tpu_custom_call.1} parent=35 // pred_check
        %p524 = pneg %p124
      $region38: #{tpu_custom_call.1} parent=35 // pred_check_branch
        %526 = sbr.rel (%p524) target = $region40
      $region39: #{tpu_custom_call.1} parent=35 // pred_region
        %s527 = smul.u32 8, %s17
      $region40: #{tpu_custom_call.1} parent=35 // pred_fallthru
        _
      // Predicated region
      $region41: #{tpu_custom_call.1} parent=35 // pred_check
        %p528 = pneg %p150
      $region42: #{tpu_custom_call.1} parent=35 // pred_check_branch
        %530 = sbr.rel (%p528) target = $region44
      $region43: #{tpu_custom_call.1} parent=35 // pred_region
        %s531 = smul.u32 8, %s17
      $region44: #{tpu_custom_call.1} parent=35 // pred_fallthru
        _
    $region36: #{tpu_custom_call.1} parent=5 // pred_fallthru
      _
    %p532 = scmp.le.s32.totalorder 2, %s12
    // Predicated region
    $region45: #{tpu_custom_call.1} parent=5 // pred_check
      %p533 = pneg %p532
    $region46: #{tpu_custom_call.1} parent=5 // pred_check_branch
      %535 = sbr.rel (%p533) target = $region48
    $region47: #{tpu_custom_call.1} parent=5 // pred_region
      %s536 = ssub.s32 %s12, 2
      // Predicated region
      $region49: #{tpu_custom_call.1} parent=47 // pred_check
        %p537 = pneg %p130
      $region50: #{tpu_custom_call.1} parent=47 // pred_check_branch
        %539 = sbr.rel (%p537) target = $region52
      $region51: #{tpu_custom_call.1} parent=47 // pred_region
        %s540 = smul.u32 8, %s18
        %p541 = scmp.lt.s32.totalorder %s540, 15
        %s542 = scalar_select %p541, %s540, 15
        %s543 = smul.addr %s542, 8
        %s544 = scalar_lea.vmem %s4, %s543
      $region52: #{tpu_custom_call.1} parent=47 // pred_fallthru
        _
      // Predicated region
      $region53: #{tpu_custom_call.1} parent=47 // pred_check
        %p545 = pneg %p156
      $region54: #{tpu_custom_call.1} parent=47 // pred_check_branch
        %547 = sbr.rel (%p545) target = $region56
      $region55: #{tpu_custom_call.1} parent=47 // pred_region
        %s548 = smul.u32 8, %s18
        %p549 = scmp.lt.s32.totalorder %s548, 15
        %s550 = scalar_select %p549, %s548, 15
        %s551 = smul.addr %s550, 8
        %s552 = scalar_lea.vmem %s5, %s551
      $region56: #{tpu_custom_call.1} parent=47 // pred_fallthru
        _
    $region48: #{tpu_custom_call.1} parent=5 // pred_fallthru
      _
  $region6: #{tpu_custom_call.1} parent=0 // loop_footer
    %s16 = sadd.s32 1, %s12
  $region7: #{tpu_custom_call.1} parent=0 // loop_footer_branch
    %11 = sbr.rel target = $region3
  $region8: #{tpu_custom_call.1} parent=0 // loop_exit
    _

</llo_original>
